<compile_context>
chip_gen: v6e
topology: v6e:2x2x1
jax: 0.10.0
libtpu: 0.0.40
codegen_flags: <defaults>
</compile_context>

<pallas_src>
import math

import numpy as np
import jax
import jax.numpy as jnp
from jax.experimental import pallas as pl
from jax.experimental.pallas import tpu as pltpu

_INV_SQRT2 = 0.7071067811865476


# ---------------------------------------------------------------------------- #
# Fused Pallas kernel: Linear(D,H) -> GELU -> Linear(H,D), H streamed.
# ---------------------------------------------------------------------------- #
def _fused_mlp_kernel(x_ref, w1_ref, b1_ref, w2_ref, b2_ref, o_ref, acc_ref):
    """One (tm rows, th hidden) step of  y = gelu(x @ W1 + b1) @ W2 + b2.

    Grid = (row tiles [parallel], hidden tiles [arbitrary reduction]).
    Each step consumes a (D, th) column slab of W1 and a (th, D) row slab of
    W2, applies the (elementwise-over-H) GELU to the (tm, th) chunk and
    accumulates the second matmul into the f32 (tm, D) scratch.
    """
    j = pl.program_id(1)

    @pl.when(j == 0)
    def _init():
        acc_ref[...] = jnp.zeros_like(acc_ref)

    # First matmul: bf16 inputs, f32 accumulation on the MXU.
    h = jnp.dot(x_ref[...], w1_ref[...], preferred_element_type=jnp.float32)
    h = h + b1_ref[...].astype(jnp.float32)
    # Exact erf-based GELU (torch.nn.GELU() default), f32 on the EUP slot.
    # (A bf16 / tanh-approx GELU would halve EUP cost on v6e/v7x at tiny D;
    #  kept exact here to match the PyTorch reference.)
    h = 0.5 * h * (1.0 + jax.lax.erf(h * _INV_SQRT2))
    # Second matmul consumes the GELU result directly as a value — no VMEM
    # scratch round trip for the intermediate activation.
    acc_ref[...] += jnp.dot(h.astype(jnp.bfloat16), w2_ref[...],
                            preferred_element_type=jnp.float32)

    @pl.when(j == pl.num_programs(1) - 1)
    def _finalize():
        # NOTE: at toy D (=32) < 128 this is a masked vst; for production make
        # D a multiple of 128 or pack row tiles into a lane-dense output slab.
        o_ref[...] = (acc_ref[...] + b2_ref[...].astype(jnp.float32)
                      ).astype(o_ref.dtype)


def _pick_hidden_tile(h):
    """Largest lane-aligned hidden tile that divides H (full H as fallback)."""
    for cand in (2048, 1024, 512, 256, 128):
        if cand <= h and h % cand == 0:
            return cand
    return h  # full extent -> always a legal BlockSpec dim


def fused_mlp(x2d, w1_kn, b1, w2_kn, b2, *, block_m=256):
    """y = gelu(x2d @ w1_kn + b1) @ w2_kn + b2, fused in one pallas_call.

    x2d: (M, D) bf16.  w1_kn: (D, H) bf16, w2_kn: (H, D) bf16 — MXU-ready
    (in, out) layout.  b1: (1, H), b2: (1, D) (bf16 FSDP shards; upcast to f32
    inside the kernel).  Output: (M, D) f32.

    block_m guidance per generation: v6e ~512 when M allows (128 MiB VMEM,
    2x256x256 MXU); v7x <=256 (64 MiB VMEM); v5e 128-256 (4x128x128 MXU).
    """
    M, D = x2d.shape
    H = w1_kn.shape[1]
    assert w1_kn.shape == (D, H) and w2_kn.shape == (H, D)
    assert b1.shape == (1, H) and b2.shape == (1, D)

    tm = max(8, (block_m // 8) * 8)          # sublane-aligned row tile
    th = _pick_hidden_tile(H)

    # Pad the row axis up to a multiple of tm instead of running tiny tiles.
    m_pad = pl.cdiv(M, tm) * tm
    if m_pad != M:
        x2d = jnp.pad(x2d, ((0, m_pad - M), (0, 0)))

    grid = (m_pad // tm, H // th)

    # Scoped-VMEM budget from the actual (double-buffered) tiles + accumulator,
    # with ~2x headroom, clamped to be safe on every generation (v7x: 64 MiB
    # physical VMEM).
    dbl = 2
    need = (dbl * tm * D * 2            # x tile (bf16)
            + dbl * D * th * 2          # W1 slab (bf16)
            + dbl * th * 2              # b1 slab (bf16)
            + dbl * th * D * 2          # W2 slab (bf16)
            + dbl * D * 2               # b2 (bf16)
            + dbl * tm * D * 4          # out tile (f32)
            + tm * D * 4)               # acc scratch (f32)
    vmem_limit = int(min(max(2 * need, 16 * 1024 * 1024), 48 * 1024 * 1024))

    cost = pl.CostEstimate(
        flops=4 * m_pad * D * H + m_pad * (H + D),        # two matmuls + bias adds
        transcendentals=m_pad * H,                        # erf
        bytes_accessed=(m_pad * D * 2 + m_pad * D * 4     # x in (bf16) + y out (f32)
                        + 2 * D * H * 2 + (H + D) * 2),   # weights + biases (bf16)
    )

    out = pl.pallas_call(
        _fused_mlp_kernel,
        out_shape=jax.ShapeDtypeStruct((m_pad, D), jnp.float32),
        grid_spec=pltpu.PrefetchScalarGridSpec(
            num_scalar_prefetch=0,
            grid=grid,
            in_specs=[
                pl.BlockSpec((tm, D), lambda i, j: (i, 0)),   # x row tile
                pl.BlockSpec((D, th), lambda i, j: (0, j)),   # W1 column slab
                pl.BlockSpec((1, th), lambda i, j: (0, j)),   # b1 slab
                pl.BlockSpec((th, D), lambda i, j: (j, 0)),   # W2 row slab
                pl.BlockSpec((1, D), lambda i, j: (0, 0)),    # b2 (constant)
            ],
            out_specs=pl.BlockSpec((tm, D), lambda i, j: (i, 0)),
            scratch_shapes=[pltpu.VMEM((tm, D), jnp.float32)],
        ),
        compiler_params=pltpu.CompilerParams(
            # Row tiles independent -> megacore sharding on v7x (2 TCs/chip);
            # hidden axis is the resident-output reduction -> "arbitrary".
            dimension_semantics=("parallel", "arbitrary"),
            vmem_limit_bytes=vmem_limit,
        ),
        cost_estimate=cost,
    )(x2d, w1_kn, b1, w2_kn, b2)

    return out[:M] if m_pad != M else out


# ---------------------------------------------------------------------------- #
# FSDPUnit simulation: flatten -> pad -> shard   /   all-gather -> unflatten
# ---------------------------------------------------------------------------- #
class FSDPUnitSim:
    """Single-device simulation of FSDPUnit.

    The leaf's params are flattened into a padded flat_param and split into
    world_size shards at init (dist.scatter); gather() reproduces the
    pre-forward dist.all_gather_into_tensor + _assign_params.

    Optimizations:
      * Linear weights are stored inside the flat_param in MXU-ready
        (in_features, out_features) layout and biases as (1, out_features),
        so gather() yields kernel-ready tensors with zero per-forward
        transposes.
      * Shards are stored in bf16 (mixed-precision FSDP): halves shard memory
        and — on a real multi-chip path — all-gather bytes, and removes the
        per-forward f32->bf16 cast of the gathered weights from the critical
        path.
    """

    def __init__(self, params, world_size, name, shard_dtype=jnp.bfloat16):
        self.name = name
        self.world_size = world_size
        self.shard_dtype = shard_dtype
        self.param_shapes = [p.shape for _, p in params]
        self.param_numels = [int(np.prod(s)) for s in self.param_shapes]
        self.total = sum(self.param_numels)
        if self.total == 0:
            self.shards = ()
            return
        padded = math.ceil(self.total / world_size) * world_size
        flat = jnp.concatenate([p.reshape(-1).astype(jnp.float32) for _, p in params])
        flat = jnp.pad(flat, (0, padded - self.total))
        self.shards = tuple(jnp.split(flat.astype(shard_dtype), world_size))  # dist.scatter

    def gather(self, shards=None):
        """all_gather_into_tensor + view slices back to per-parameter shapes."""
        if self.total == 0:
            return []
        if shards is None:
            shards = self.shards
        flat = jnp.concatenate(shards)[: self.total]
        out, off = [], 0
        for shp, n in zip(self.param_shapes, self.param_numels):
            out.append(flat[off:off + n].reshape(shp))
            off += n
        return out


class CustomFSDPSim:
    """CustomFSDP over nn.Sequential(Linear(D,H), GELU(), Linear(H,D)).

    One FSDPUnit per leaf module, exactly like _create_fsdp_units_for_gpt."""

    def __init__(self, d_model, d_hidden, world_size, rank, key, block_m=256):
        self.world_size = world_size
        self.rank = rank
        self.block_m = block_m
        # deterministic param_init_fn: weights ~ N(0, 0.02), biases = 0.
        # Weights are generated directly in (in, out) layout; math is identical
        # to torch.nn.Linear's y = x @ W^T + b.
        k1, k2 = jax.random.split(key)
        w1_kn = (0.02 * jax.random.normal(k1, (d_model, d_hidden))).astype(jnp.float32)
        b1 = jnp.zeros((1, d_hidden), jnp.float32)
        w2_kn = (0.02 * jax.random.normal(k2, (d_hidden, d_model))).astype(jnp.float32)
        b2 = jnp.zeros((1, d_model), jnp.float32)
        self.fsdp_units = [
            FSDPUnitSim([("weight", w1_kn), ("bias", b1)], world_size, "0"),  # Linear(D,H)
            FSDPUnitSim([], world_size, "1"),                                  # GELU (no params)
            FSDPUnitSim([("weight", w2_kn), ("bias", b2)], world_size, "2"),  # Linear(H,D)
        ]
        # Jit the whole forward so the all-gather glue (concat + slice + reshape)
        # fuses with / overlaps the fused kernel instead of serializing as eager
        # HBM ops on the critical path.
        self._forward_jit = jax.jit(self._forward_impl)
        # TODO(synk): the real multi-chip path would replace the jnp.concatenate
        # all-gather with an in-kernel ring all-gather (make_async_remote_copy +
        # barrier semaphore, collective_id) interleaved with the H reduction
        # loop; omitted in this single-device simulation.
        # TODO(synk): torch.cuda memory instrumentation / empty_cache / gc hooks
        # have no Pallas equivalent and are omitted.

    def _forward_impl(self, x, shards0, shards2):
        B, S, D = x.shape
        # bf16 cast done here (not in the kernel): halves x HBM->VMEM DMA bytes
        # per tile and removes the per-tile VPU cast.
        h = x.reshape(B * S, D).astype(jnp.bfloat16)
        # pre-forward hooks: all-gather each parametrized unit's shards (already
        # bf16 and MXU-ready).
        w1, b1 = self.fsdp_units[0].gather(shards0)
        w2, b2 = self.fsdp_units[2].gather(shards2)
        # Fused Linear -> GELU -> Linear (GELU unit has no params; its hooks are
        # no-ops on an empty flat_param).
        y = fused_mlp(h, w1, b1, w2, b2, block_m=self.block_m)
        # post-forward hooks: re-shard (gathered tensors go out of scope).
        return y.reshape(B, S, D)

    def forward(self, x):
        return self._forward_jit(x,
                                 self.fsdp_units[0].shards,
                                 self.fsdp_units[2].shards)


# ---------------------------------------------------------------------------- #
def _reference_forward(x, model):
    """Pure-JAX f32 reference of CustomFSDP.forward (same bf16 stored params)."""
    w1, b1 = [t.astype(jnp.float32) for t in model.fsdp_units[0].gather()]
    w2, b2 = [t.astype(jnp.float32) for t in model.fsdp_units[2].gather()]
    B, S, D = x.shape
    h = x.reshape(B * S, D)
    h = h @ w1 + b1
    h = 0.5 * h * (1.0 + jax.lax.erf(h * _INV_SQRT2))
    h = h @ w2 + b2
    return h.reshape(B, S, D)


if __name__ == "__main__":
    B, S, D = 2, 8, 32
    H = 4 * D                       # 128
    WORLD_SIZE, RANK = 4, 0

    key = jax.random.PRNGKey(0)
    k_x, k_p = jax.random.split(key)
    x = jax.random.normal(k_x, (B, S, D), dtype=jnp.float32)

    # block_m=128: M (=16) is padded up to one 128-row tile instead of running
    # a grid of tiny 8-row tiles (at real sizes use 256/512 per generation).
    model = CustomFSDPSim(D, H, WORLD_SIZE, RANK, k_p, block_m=128)

    out = jax.block_until_ready(model.forward(x))
    ref = _reference_forward(x, model)

    # bf16 MXU inputs / bf16 intermediate activation with f32 accumulation ->
    # looser tolerance than pure f32 (documented precision tradeoff; the
    # mismatch grows ~sqrt(H) at real widths).
    np.testing.assert_allclose(np.asarray(out), np.asarray(ref),
                               rtol=2e-2, atol=2e-3)
    print("KERNEL_OK")
</pallas_src>

<mosaic_0001>
module attributes {stable_mosaic.version = 11 : i64} {
  func.func @_fused_mlp_kernel(%arg0: i32, %arg1: i32, %arg2: memref<128x32xbf16, #tpu.memory_space<vmem>>, %arg3: memref<32x128xbf16, #tpu.memory_space<vmem>>, %arg4: memref<1x128xbf16, #tpu.memory_space<vmem>>, %arg5: memref<128x32xbf16, #tpu.memory_space<vmem>>, %arg6: memref<1x32xbf16, #tpu.memory_space<vmem>>, %arg7: memref<128x32xf32, #tpu.memory_space<vmem>>, %arg8: memref<128x32xf32, #tpu.memory_space<vmem>>) attributes {dimension_semantics = [#tpu.dimension_semantics<parallel>, #tpu.dimension_semantics<arbitrary>], iteration_bounds = array<i64: 1, 1>, scalar_prefetch = 0 : i64, scratch_operands = 1 : i64, tpu.core_type = #tpu.core_type<tc>, window_params = [{transform_indices = @transform_0, window_bounds = array<i64: 128, 32>}, {transform_indices = @transform_1, window_bounds = array<i64: 32, 128>}, {transform_indices = @transform_2, window_bounds = array<i64: 1, 128>}, {transform_indices = @transform_3, window_bounds = array<i64: 128, 32>}, {pipeline_mode = #tpu.pipeline_mode<synchronous>, transform_indices = @transform_4, window_bounds = array<i64: 1, 32>}, {transform_indices = @transform_5, window_bounds = array<i64: 128, 32>}]} {
    %c0_i32 = arith.constant 0 : i32
    %0 = arith.cmpi eq, %arg1, %c0_i32 : i32
    %1 = arith.extui %0 : i1 to i32
    %c0_i32_0 = arith.constant 0 : i32
    %2 = arith.cmpi ne, %1, %c0_i32_0 : i32
    scf.if %2 {
      %cst_18 = arith.constant 0.000000e+00 : f32
      %27 = vector.broadcast %cst_18 : f32 to vector<128x32xf32>
      %c0_19 = arith.constant 0 : index
      %c0_20 = arith.constant 0 : index
      %28 = vector.load %arg8[%c0_19, %c0_20] : memref<128x32xf32, #tpu.memory_space<vmem>>, vector<128x32xf32>
      tpu.vector_store %arg8[%c0_19, %c0_20], %27 {strides = array<i32>} : memref<128x32xf32, #tpu.memory_space<vmem>>, vector<128x32xf32>,
    } else {
    }
    %c0 = arith.constant 0 : index
    %c0_1 = arith.constant 0 : index
    %3 = vector.load %arg2[%c0, %c0_1] : memref<128x32xbf16, #tpu.memory_space<vmem>>, vector<128x32xbf16>
    %c0_2 = arith.constant 0 : index
    %c0_3 = arith.constant 0 : index
    %4 = vector.load %arg3[%c0_2, %c0_3] : memref<32x128xbf16, #tpu.memory_space<vmem>>, vector<32x128xbf16>
    %cst = arith.constant dense<0.000000e+00> : vector<128x128xf32>
    %5 = tpu.matmul %3, %4, %cst {dimension_numbers = #tpu.dot_dimension_numbers<[1], [0], [0], [1], [0, 0, 1, 1], [], []>} : vector<128x32xbf16>, vector<32x128xbf16>, vector<128x128xf32> -> vector<128x128xf32>
    %c0_4 = arith.constant 0 : index
    %c0_5 = arith.constant 0 : index
    %6 = vector.load %arg4[%c0_4, %c0_5] : memref<1x128xbf16, #tpu.memory_space<vmem>>, vector<1x128xbf16>
    %7 = arith.extf %6 : vector<1x128xbf16> to vector<1x128xf32>
    %8 = vector.broadcast %7 : vector<1x128xf32> to vector<128x128xf32>
    %9 = arith.addf %5, %8 : vector<128x128xf32>
    %cst_6 = arith.constant 5.000000e-01 : f32
    %10 = vector.broadcast %cst_6 : f32 to vector<128x128xf32>
    %11 = arith.mulf %10, %9 : vector<128x128xf32>
    %cst_7 = arith.constant 0.707106769 : f32
    %12 = vector.broadcast %cst_7 : f32 to vector<128x128xf32>
    %13 = arith.mulf %9, %12 : vector<128x128xf32>
    %14 = math.erf %13 : vector<128x128xf32>
    %cst_8 = arith.constant 1.000000e+00 : f32
    %15 = vector.broadcast %cst_8 : f32 to vector<128x128xf32>
    %16 = arith.addf %15, %14 : vector<128x128xf32>
    %17 = arith.mulf %11, %16 : vector<128x128xf32>
    %c0_9 = arith.constant 0 : index
    %c0_10 = arith.constant 0 : index
    %18 = vector.load %arg8[%c0_9, %c0_10] : memref<128x32xf32, #tpu.memory_space<vmem>>, vector<128x32xf32>
    %19 = arith.truncf %17 : vector<128x128xf32> to vector<128x128xbf16>
    %c0_11 = arith.constant 0 : index
    %c0_12 = arith.constant 0 : index
    %20 = vector.load %arg5[%c0_11, %c0_12] : memref<128x32xbf16, #tpu.memory_space<vmem>>, vector<128x32xbf16>
    %cst_13 = arith.constant dense<0.000000e+00> : vector<128x32xf32>
    %21 = tpu.matmul %19, %20, %cst_13 {dimension_numbers = #tpu.dot_dimension_numbers<[1], [0], [0], [1], [0, 0, 1, 1], [], []>} : vector<128x128xbf16>, vector<128x32xbf16>, vector<128x32xf32> -> vector<128x32xf32>
    %22 = arith.addf %18, %21 : vector<128x32xf32>
    %c0_14 = arith.constant 0 : index
    %c0_15 = arith.constant 0 : index
    %23 = vector.load %arg8[%c0_14, %c0_15] : memref<128x32xf32, #tpu.memory_space<vmem>>, vector<128x32xf32>
    tpu.vector_store %arg8[%c0_14, %c0_15], %22 {strides = array<i32>} : memref<128x32xf32, #tpu.memory_space<vmem>>, vector<128x32xf32>,
    %c0_i32_16 = arith.constant 0 : i32
    %24 = arith.cmpi eq, %arg1, %c0_i32_16 : i32
    %25 = arith.extui %24 : i1 to i32
    %c0_i32_17 = arith.constant 0 : i32
    %26 = arith.cmpi ne, %25, %c0_i32_17 : i32
    scf.if %26 {
      %c0_18 = arith.constant 0 : index
      %c0_19 = arith.constant 0 : index
      %27 = vector.load %arg8[%c0_18, %c0_19] : memref<128x32xf32, #tpu.memory_space<vmem>>, vector<128x32xf32>
      %c0_20 = arith.constant 0 : index
      %c0_21 = arith.constant 0 : index
      %28 = vector.load %arg6[%c0_20, %c0_21] : memref<1x32xbf16, #tpu.memory_space<vmem>>, vector<1x32xbf16>
      %29 = arith.extf %28 : vector<1x32xbf16> to vector<1x32xf32>
      %30 = vector.broadcast %29 : vector<1x32xf32> to vector<128x32xf32>
      %31 = arith.addf %27, %30 : vector<128x32xf32>
      %c0_22 = arith.constant 0 : index
      %c0_23 = arith.constant 0 : index
      %32 = vector.load %arg7[%c0_22, %c0_23] : memref<128x32xf32, #tpu.memory_space<vmem>>, vector<128x32xf32>
      tpu.vector_store %arg7[%c0_22, %c0_23], %31 {strides = array<i32>} : memref<128x32xf32, #tpu.memory_space<vmem>>, vector<128x32xf32>,
    } else {
    }
    return
  }
  func.func @transform_0(%arg0: i32, %arg1: i32) -> (i32, i32) {
    %c0_i32 = arith.constant 0 : i32
    %c0_i32_0 = arith.constant 0 : i32
    return %arg0, %c0_i32 : i32, i32
  }
  func.func @transform_1(%arg0: i32, %arg1: i32) -> (i32, i32) {
    %c0_i32 = arith.constant 0 : i32
    %c0_i32_0 = arith.constant 0 : i32
    return %c0_i32, %arg1 : i32, i32
  }
  func.func @transform_2(%arg0: i32, %arg1: i32) -> (i32, i32) {
    %c0_i32 = arith.constant 0 : i32
    %c0_i32_0 = arith.constant 0 : i32
    return %c0_i32, %arg1 : i32, i32
  }
  func.func @transform_3(%arg0: i32, %arg1: i32) -> (i32, i32) {
    %c0_i32 = arith.constant 0 : i32
    %c0_i32_0 = arith.constant 0 : i32
    return %arg1, %c0_i32 : i32, i32
  }
  func.func @transform_4(%arg0: i32, %arg1: i32) -> (i32, i32) {
    %c0_i32 = arith.constant 0 : i32
    %c0_i32_0 = arith.constant 0 : i32
    %c0_i32_1 = arith.constant 0 : i32
    return %c0_i32, %c0_i32_0 : i32, i32
  }
  func.func @transform_5(%arg0: i32, %arg1: i32) -> (i32, i32) {
    %c0_i32 = arith.constant 0 : i32
    %c0_i32_0 = arith.constant 0 : i32
    return %arg0, %c0_i32 : i32, i32
  }
}

</mosaic_0001>

<llo_original>
// kernel: _forward_impl.1
$region0: #{_forward_impl.1}
  #allocation0 [shape = 'u32[]', space=smem, size = 0x4, offset = 0x4, fixed_abs, tag = 'smem constant byte address 0x4 - core index']
  #allocation1 [shape = 'u32[144,128]{1,0:T(1,128)}', space=vmem, size = 0x12000, scoped, tag = 'internal scratch']
  #allocation2 [shape = 'f32[128,32]{1,0:T(8,128)}', space=vmem, size = 0x10000, scoped, tag = 'scratch operand']
  %s0 = inlined_call_operand.vmem [shape: bf16[128,32], index: 0, kind: input, shape index: {}]
  %s1 = inlined_call_operand.vmem [shape: bf16[32,128], index: 1, kind: input, shape index: {}]
  %s2 = inlined_call_operand.vmem [shape: bf16[1,128], index: 2, kind: input, shape index: {}]
  %s3 = inlined_call_operand.vmem [shape: bf16[128,32], index: 3, kind: input, shape index: {}]
  %s4 = inlined_call_operand.vmem [shape: bf16[1,32], index: 4, kind: input, shape index: {}]
  %s5 = inlined_call_operand.vmem [shape: f32[128,32], index: 5, kind: output, shape index: {}]
  %s6 = sld [smem:[#allocation0]]
  $region38: #{_forward_impl.1} parent=0
    _
  %s8 = ssub.s32 1, %s6
  %s9 = scalar_select 0, %s8, %s6
  // Predicated region
  $region2: #{_forward_impl.1} parent=0 // pred_check
    _
  $region3: #{_forward_impl.1} parent=0 // pred_check_branch
    %11 = sbr.rel (0) target = $region5
  $region4: #{_forward_impl.1} parent=0 // pred_region
    _
  $region5: #{_forward_impl.1} parent=0 // pred_fallthru
    _
  // Predicated region
  $region6: #{_forward_impl.1} parent=0 // pred_check
    _
  $region7: #{_forward_impl.1} parent=0 // pred_check_branch
    %13 = sbr.rel (0) target = $region9
  $region8: #{_forward_impl.1} parent=0 // pred_region
    _
  $region9: #{_forward_impl.1} parent=0 // pred_fallthru
    _
  // Predicated region
  $region10: #{_forward_impl.1} parent=0 // pred_check
    _
  $region11: #{_forward_impl.1} parent=0 // pred_check_branch
    %15 = sbr.rel (0) target = $region13
  $region12: #{_forward_impl.1} parent=0 // pred_region
    _
  $region13: #{_forward_impl.1} parent=0 // pred_fallthru
    _
  // Predicated region
  $region14: #{_forward_impl.1} parent=0 // pred_check
    _
  $region15: #{_forward_impl.1} parent=0 // pred_check_branch
    %17 = sbr.rel (0) target = $region17
  $region16: #{_forward_impl.1} parent=0 // pred_region
    _
  $region17: #{_forward_impl.1} parent=0 // pred_fallthru
    _
  // Predicated region
  $region18: #{_forward_impl.1} parent=0 // pred_check
    _
  $region19: #{_forward_impl.1} parent=0 // pred_check_branch
    %19 = sbr.rel (0) target = $region21
  $region20: #{_forward_impl.1} parent=0 // pred_region
    _
  $region21: #{_forward_impl.1} parent=0 // pred_fallthru
    _
  %p21 = scmp.eq.s32.totalorder 0, 0
  // Predicated region
  $region22: #{_forward_impl.1} parent=0 // pred_check
    %p22 = pneg %p21
  $region23: #{_forward_impl.1} parent=0 // pred_check_branch
    %24 = sbr.rel (%p22) target = $region25
  $region24: #{_forward_impl.1} parent=0 // pred_region
    %vm25 = vcmask 261120
    %26 = vst.msk [vmem:[#allocation2] sm:$0xff] %vm25, 0.0
    %27 = vst.msk [vmem:[#allocation2 + $0x8] sm:$0xff] %vm25, 0.0
    %28 = vst.msk [vmem:[#allocation2 + $0x10] sm:$0xff] %vm25, 0.0
    %29 = vst.msk [vmem:[#allocation2 + $0x18] sm:$0xff] %vm25, 0.0
    %30 = vst.msk [vmem:[#allocation2 + $0x20] sm:$0xff] %vm25, 0.0
    %31 = vst.msk [vmem:[#allocation2 + $0x28] sm:$0xff] %vm25, 0.0
    %32 = vst.msk [vmem:[#allocation2 + $0x30] sm:$0xff] %vm25, 0.0
    %33 = vst.msk [vmem:[#allocation2 + $0x38] sm:$0xff] %vm25, 0.0
    %34 = vst.msk [vmem:[#allocation2 + $0x40] sm:$0xff] %vm25, 0.0
    %35 = vst.msk [vmem:[#allocation2 + $0x48] sm:$0xff] %vm25, 0.0
    %36 = vst.msk [vmem:[#allocation2 + $0x50] sm:$0xff] %vm25, 0.0
    %37 = vst.msk [vmem:[#allocation2 + $0x58] sm:$0xff] %vm25, 0.0
    %38 = vst.msk [vmem:[#allocation2 + $0x60] sm:$0xff] %vm25, 0.0
    %39 = vst.msk [vmem:[#allocation2 + $0x68] sm:$0xff] %vm25, 0.0
    %40 = vst.msk [vmem:[#allocation2 + $0x70] sm:$0xff] %vm25, 0.0
    %41 = vst.msk [vmem:[#allocation2 + $0x78] sm:$0xff] %vm25, 0.0
  $region25: #{_forward_impl.1} parent=0 // pred_fallthru
    _
  %v42 = vld [vmem:[%s0] sm:$0xf]
  %v43 = vld [vmem:[%s0 + $0x4] sm:$0xf]
  %v44 = vld [vmem:[%s0 + $0x8] sm:$0xf]
  %v45 = vld [vmem:[%s0 + $0xc] sm:$0xf]
  %v46 = vld [vmem:[%s0 + $0x10] sm:$0xf]
  %v47 = vld [vmem:[%s0 + $0x14] sm:$0xf]
  %v48 = vld [vmem:[%s0 + $0x18] sm:$0xf]
  %v49 = vld [vmem:[%s0 + $0x1c] sm:$0xf]
  %v50 = vld [vmem:[%s0 + $0x20] sm:$0xf]
  %v51 = vld [vmem:[%s0 + $0x24] sm:$0xf]
  %v52 = vld [vmem:[%s0 + $0x28] sm:$0xf]
  %v53 = vld [vmem:[%s0 + $0x2c] sm:$0xf]
  %v54 = vld [vmem:[%s0 + $0x30] sm:$0xf]
  %v55 = vld [vmem:[%s0 + $0x34] sm:$0xf]
  %v56 = vld [vmem:[%s0 + $0x38] sm:$0xf]
  %v57 = vld [vmem:[%s0 + $0x3c] sm:$0xf]
  %v58 = vld [vmem:[%s1] sm:$0xf]
  %v59 = vld [vmem:[%s1 + $0x4] sm:$0xf]
  %v60 = vld [vmem:[%s1 + $0x8] sm:$0xf]
  %v61 = vld [vmem:[%s1 + $0xc] sm:$0xf]
  %v62 = vld [vmem:[%s2] sm:$0x1]
  %v63 = vunpack.c.l.bf16 %v62
  %v64 = vlaneseq
  %v65 = vshrl.u32 %v64, 7
  %v66 = vsub.s32 0, %v65
  %v67 = vrot.slane %v63, %v66
  %v84 = vunpack.c.l.b16 %v42
  %v85 = vunpack.c.l.b16 %v43
  %v86 = vunpack.c.l.b16 %v44
  %v87 = vunpack.c.l.b16 %v45
  %v88 = vunpack.c.l.b16 %v46
  %v89 = vunpack.c.l.b16 %v47
  %v90 = vunpack.c.l.b16 %v48
  %v91 = vunpack.c.l.b16 %v49
  %v92 = vunpack.c.l.b16 %v50
  %v93 = vunpack.c.l.b16 %v51
  %v94 = vunpack.c.l.b16 %v52
  %v95 = vunpack.c.l.b16 %v53
  %v96 = vunpack.c.l.b16 %v54
  %v97 = vunpack.c.l.b16 %v55
  %v98 = vunpack.c.l.b16 %v56
  %v99 = vunpack.c.l.b16 %v57
  %v100 = vpack.c.b16 %v85, %v84
  %v101 = vpack.c.b16 %v87, %v86
  %v102 = vpack.c.b16 %v89, %v88
  %v103 = vpack.c.b16 %v91, %v90
  %v104 = vpack.c.b16 %v93, %v92
  %v105 = vpack.c.b16 %v95, %v94
  %v106 = vpack.c.b16 %v97, %v96
  %v107 = vpack.c.b16 %v99, %v98
  %v112 = vunpack.c.l.b16 %v58
  %v113 = vunpack.c.l.b16 %v59
  %v114 = vunpack.c.l.b16 %v60
  %v115 = vunpack.c.l.b16 %v61
  %v116 = vpack.c.b16 %v113, %v112
  %v117 = vpack.c.b16 %v115, %v114
  %vm120 = vcmask 261120
  %v122 = vsel %vm120, %v100, 0
  %v125 = vsel %vm120, %v101, 0
  %v128 = vsel %vm120, %v102, 0
  %v131 = vsel %vm120, %v103, 0
  %v134 = vsel %vm120, %v104, 0
  %v137 = vsel %vm120, %v105, 0
  %v140 = vsel %vm120, %v106, 0
  %v143 = vsel %vm120, %v107, 0
  %145 = vmatprep.subr.bf16.mxu0 0
  %146 = vmatpush1.bf16.msra.mxu0 0
  %147 = vmatprep.subr.bf16.mxu0 0
  %148 = vmatpush1.bf16.msra.mxu0 0
  %149 = vmatprep.subr.bf16.mxu0 0
  %150 = vmatpush1.bf16.msra.mxu0 0
  %151 = vmatprep.subr.bf16.mxu0 0
  %152 = vmatpush1.bf16.msra.mxu0 0
  %153 = vmatprep.subr.bf16.mxu0 0
  %154 = vmatpush1.bf16.msra.mxu0 0
  %155 = vmatprep.subr.bf16.mxu0 0
  %156 = vmatpush1.bf16.msra.mxu0 0
  %157 = vmatprep.subr.bf16.mxu0 0
  %158 = vmatpush1.bf16.msra.mxu0 %v117
  %159 = vmatprep.subr.bf16.mxu0 0
  %160 = vmatpush1.bf16.msra.mxu0 %v116
  %161 = vmatprep.subr.bf16.mxu0 0
  %162 = vmatpush2.bf16.msra.mxu0 0
  %163 = vmatprep.subr.bf16.mxu0 0
  %164 = vmatpush2.bf16.msra.mxu0 0
  %165 = vmatprep.subr.bf16.mxu0 0
  %166 = vmatpush2.bf16.msra.mxu0 0
  %167 = vmatprep.subr.bf16.mxu0 0
  %168 = vmatpush2.bf16.msra.mxu0 0
  %169 = vmatprep.subr.bf16.mxu0 0
  %170 = vmatpush2.bf16.msra.mxu0 0
  %171 = vmatprep.subr.bf16.mxu0 0
  %172 = vmatpush2.bf16.msra.mxu0 0
  %173 = vmatprep.subr.bf16.mxu0 0
  %174 = vmatpush2.bf16.msra.mxu0 0
  %175 = vmatprep.subr.bf16.mxu0 0
  %176 = vmatpush2.bf16.msra.mxu0 0
  %177 = vmatprep.mubr.bf16.mxu0 0
  %178 = vmatmul.mubr.bf16.gmra.mxu0 %v122
  %v179 = vpop.f32.mrf.mxu0
  %v180 = vadd.f32 %v67, %v179
  %v181 = vpop.f32.mrf.mxu0
  %v182 = vpop.f32.mrf.mxu0
  %v183 = vadd.f32 %v67, %v182
  %v184 = vpop.f32.mrf.mxu0
  %185 = vmatprep.mubr.bf16.mxu0 0
  %186 = vmatmul.mubr.bf16.gmra.mxu0 %v125
  %v187 = vpop.f32.mrf.mxu0
  %v188 = vadd.f32 %v67, %v187
  %v189 = vpop.f32.mrf.mxu0
  %v190 = vpop.f32.mrf.mxu0
  %v191 = vadd.f32 %v67, %v190
  %v192 = vpop.f32.mrf.mxu0
  %193 = vmatprep.mubr.bf16.mxu0 0
  %194 = vmatmul.mubr.bf16.gmra.mxu0 %v128
  %v195 = vpop.f32.mrf.mxu0
  %v196 = vadd.f32 %v67, %v195
  %v197 = vpop.f32.mrf.mxu0
  %v198 = vpop.f32.mrf.mxu0
  %v199 = vadd.f32 %v67, %v198
  %v200 = vpop.f32.mrf.mxu0
  %201 = vmatprep.mubr.bf16.mxu0 0
  %202 = vmatmul.mubr.bf16.gmra.mxu0 %v131
  %v203 = vpop.f32.mrf.mxu0
  %v204 = vadd.f32 %v67, %v203
  %v205 = vpop.f32.mrf.mxu0
  %v206 = vpop.f32.mrf.mxu0
  %v207 = vadd.f32 %v67, %v206
  %v208 = vpop.f32.mrf.mxu0
  %209 = vmatprep.mubr.bf16.mxu0 0
  %210 = vmatmul.mubr.bf16.gmra.mxu0 %v134
  %v211 = vpop.f32.mrf.mxu0
  %v212 = vadd.f32 %v67, %v211
  %v213 = vpop.f32.mrf.mxu0
  %v214 = vpop.f32.mrf.mxu0
  %v215 = vadd.f32 %v67, %v214
  %v216 = vpop.f32.mrf.mxu0
  %217 = vmatprep.mubr.bf16.mxu0 0
  %218 = vmatmul.mubr.bf16.gmra.mxu0 %v137
  %v219 = vpop.f32.mrf.mxu0
  %v220 = vadd.f32 %v67, %v219
  %v221 = vpop.f32.mrf.mxu0
  %v222 = vpop.f32.mrf.mxu0
  %v223 = vadd.f32 %v67, %v222
  %v224 = vpop.f32.mrf.mxu0
  %225 = vmatprep.mubr.bf16.mxu0 0
  %226 = vmatmul.mubr.bf16.gmra.mxu0 %v140
  %v227 = vpop.f32.mrf.mxu0
  %v228 = vadd.f32 %v67, %v227
  %v229 = vpop.f32.mrf.mxu0
  %v230 = vpop.f32.mrf.mxu0
  %v231 = vadd.f32 %v67, %v230
  %v232 = vpop.f32.mrf.mxu0
  %233 = vmatprep.mubr.bf16.mxu0 0
  %234 = vmatmul.mubr.bf16.gmra.mxu0 %v143
  %v235 = vpop.f32.mrf.mxu0
  %v236 = vadd.f32 %v67, %v235
  %v237 = vpop.f32.mrf.mxu0
  %v238 = vpop.f32.mrf.mxu0
  %v239 = vadd.f32 %v67, %v238
  %v240 = vpop.f32.mrf.mxu0
  %241 = vdwg.mxu0
  %v242 = vmul.f32 %v180, 0.5
  %v243 = vmul.f32 %v183, 0.5
  %v244 = vmul.f32 %v188, 0.5
  %v245 = vmul.f32 %v191, 0.5
  %v246 = vmul.f32 %v196, 0.5
  %v247 = vmul.f32 %v199, 0.5
  %v248 = vmul.f32 %v204, 0.5
  %v249 = vmul.f32 %v207, 0.5
  %v250 = vmul.f32 %v212, 0.5
  %v251 = vmul.f32 %v215, 0.5
  %v252 = vmul.f32 %v220, 0.5
  %v253 = vmul.f32 %v223, 0.5
  %v254 = vmul.f32 %v228, 0.5
  %v255 = vmul.f32 %v231, 0.5
  %v256 = vmul.f32 %v236, 0.5
  %v257 = vmul.f32 %v239, 0.5
  %v258 = vmul.f32 %v180, 0.70710677
  %v259 = vmul.f32 %v183, 0.70710677
  %v260 = vmul.f32 %v188, 0.70710677
  %v261 = vmul.f32 %v191, 0.70710677
  %v262 = vmul.f32 %v196, 0.70710677
  %v263 = vmul.f32 %v199, 0.70710677
  %v264 = vmul.f32 %v204, 0.70710677
  %v265 = vmul.f32 %v207, 0.70710677
  %v266 = vmul.f32 %v212, 0.70710677
  %v267 = vmul.f32 %v215, 0.70710677
  %v268 = vmul.f32 %v220, 0.70710677
  %v269 = vmul.f32 %v223, 0.70710677
  %v270 = vmul.f32 %v228, 0.70710677
  %v271 = vmul.f32 %v231, 0.70710677
  %v272 = vmul.f32 %v236, 0.70710677
  %v273 = vmul.f32 %v239, 0.70710677
  %v274 = verf.f32.pop %v258
  %v275 = verf.f32.pop %v259
  %v276 = verf.f32.pop %v260
  %v277 = verf.f32.pop %v261
  %v278 = verf.f32.pop %v262
  %v279 = verf.f32.pop %v263
  %v280 = verf.f32.pop %v264
  %v281 = verf.f32.pop %v265
  %v282 = verf.f32.pop %v266
  %v283 = verf.f32.pop %v267
  %v284 = verf.f32.pop %v268
  %v285 = verf.f32.pop %v269
  %v286 = verf.f32.pop %v270
  %v287 = verf.f32.pop %v271
  %v288 = verf.f32.pop %v272
  %v289 = verf.f32.pop %v273
  %v290 = vadd.f32 %v274, 1.0
  %v291 = vadd.f32 %v275, 1.0
  %v292 = vadd.f32 %v276, 1.0
  %v293 = vadd.f32 %v277, 1.0
  %v294 = vadd.f32 %v278, 1.0
  %v295 = vadd.f32 %v279, 1.0
  %v296 = vadd.f32 %v280, 1.0
  %v297 = vadd.f32 %v281, 1.0
  %v298 = vadd.f32 %v282, 1.0
  %v299 = vadd.f32 %v283, 1.0
  %v300 = vadd.f32 %v284, 1.0
  %v301 = vadd.f32 %v285, 1.0
  %v302 = vadd.f32 %v286, 1.0
  %v303 = vadd.f32 %v287, 1.0
  %v304 = vadd.f32 %v288, 1.0
  %v305 = vadd.f32 %v289, 1.0
  %v306 = vmul.f32 %v242, %v290
  %v307 = vmul.f32 %v243, %v291
  %v308 = vmul.f32 %v244, %v292
  %v309 = vmul.f32 %v245, %v293
  %v310 = vmul.f32 %v246, %v294
  %v311 = vmul.f32 %v247, %v295
  %v312 = vmul.f32 %v248, %v296
  %v313 = vmul.f32 %v249, %v297
  %v314 = vmul.f32 %v250, %v298
  %v315 = vmul.f32 %v251, %v299
  %v316 = vmul.f32 %v252, %v300
  %v317 = vmul.f32 %v253, %v301
  %v318 = vmul.f32 %v254, %v302
  %v319 = vmul.f32 %v255, %v303
  %v320 = vmul.f32 %v256, %v304
  %v321 = vmul.f32 %v257, %v305
  %v322 = vld [vmem:[#allocation2] sm:$0xff]
  %v323 = vld [vmem:[#allocation2 + $0x8] sm:$0xff]
  %v324 = vld [vmem:[#allocation2 + $0x10] sm:$0xff]
  %v325 = vld [vmem:[#allocation2 + $0x18] sm:$0xff]
  %v326 = vld [vmem:[#allocation2 + $0x20] sm:$0xff]
  %v327 = vld [vmem:[#allocation2 + $0x28] sm:$0xff]
  %v328 = vld [vmem:[#allocation2 + $0x30] sm:$0xff]
  %v329 = vld [vmem:[#allocation2 + $0x38] sm:$0xff]
  %v330 = vld [vmem:[#allocation2 + $0x40] sm:$0xff]
  %v331 = vld [vmem:[#allocation2 + $0x48] sm:$0xff]
  %v332 = vld [vmem:[#allocation2 + $0x50] sm:$0xff]
  %v333 = vld [vmem:[#allocation2 + $0x58] sm:$0xff]
  %v334 = vld [vmem:[#allocation2 + $0x60] sm:$0xff]
  %v335 = vld [vmem:[#allocation2 + $0x68] sm:$0xff]
  %v336 = vld [vmem:[#allocation2 + $0x70] sm:$0xff]
  %v337 = vld [vmem:[#allocation2 + $0x78] sm:$0xff]
  %v338 = vpack.c.bf16 %v307, %v306
  %v339 = vpack.c.bf16 %v309, %v308
  %v340 = vpack.c.bf16 %v311, %v310
  %v341 = vpack.c.bf16 %v313, %v312
  %v342 = vpack.c.bf16 %v315, %v314
  %v343 = vpack.c.bf16 %v317, %v316
  %v344 = vpack.c.bf16 %v319, %v318
  %v345 = vpack.c.bf16 %v321, %v320
  %v346 = vld [vmem:[%s3] sm:$0xf]
  %v347 = vld [vmem:[%s3 + $0x4] sm:$0xf]
  %v348 = vld [vmem:[%s3 + $0x8] sm:$0xf]
  %v349 = vld [vmem:[%s3 + $0xc] sm:$0xf]
  %v350 = vld [vmem:[%s3 + $0x10] sm:$0xf]
  %v351 = vld [vmem:[%s3 + $0x14] sm:$0xf]
  %v352 = vld [vmem:[%s3 + $0x18] sm:$0xf]
  %v353 = vld [vmem:[%s3 + $0x1c] sm:$0xf]
  %v354 = vld [vmem:[%s3 + $0x20] sm:$0xf]
  %v355 = vld [vmem:[%s3 + $0x24] sm:$0xf]
  %v356 = vld [vmem:[%s3 + $0x28] sm:$0xf]
  %v357 = vld [vmem:[%s3 + $0x2c] sm:$0xf]
  %v358 = vld [vmem:[%s3 + $0x30] sm:$0xf]
  %v359 = vld [vmem:[%s3 + $0x34] sm:$0xf]
  %v360 = vld [vmem:[%s3 + $0x38] sm:$0xf]
  %v361 = vld [vmem:[%s3 + $0x3c] sm:$0xf]
  %v378 = vunpack.c.l.b16 %v346
  %v379 = vunpack.c.l.b16 %v347
  %v380 = vunpack.c.l.b16 %v348
  %v381 = vunpack.c.l.b16 %v349
  %v382 = vunpack.c.l.b16 %v350
  %v383 = vunpack.c.l.b16 %v351
  %v384 = vunpack.c.l.b16 %v352
  %v385 = vunpack.c.l.b16 %v353
  %v386 = vunpack.c.l.b16 %v354
  %v387 = vunpack.c.l.b16 %v355
  %v388 = vunpack.c.l.b16 %v356
  %v389 = vunpack.c.l.b16 %v357
  %v390 = vunpack.c.l.b16 %v358
  %v391 = vunpack.c.l.b16 %v359
  %v392 = vunpack.c.l.b16 %v360
  %v393 = vunpack.c.l.b16 %v361
  %v394 = vpack.c.b16 %v379, %v378
  %v395 = vpack.c.b16 %v381, %v380
  %v396 = vpack.c.b16 %v383, %v382
  %v397 = vpack.c.b16 %v385, %v384
  %v398 = vpack.c.b16 %v387, %v386
  %v399 = vpack.c.b16 %v389, %v388
  %v400 = vpack.c.b16 %v391, %v390
  %v401 = vpack.c.b16 %v393, %v392
  %410 = vmatprep.subr.bf16.mxu0 0
  %411 = vmatpush1.bf16.msra.mxu0 %v401
  %412 = vmatprep.subr.bf16.mxu0 0
  %413 = vmatpush1.bf16.msra.mxu0 %v400
  %414 = vmatprep.subr.bf16.mxu0 0
  %415 = vmatpush1.bf16.msra.mxu0 %v399
  %416 = vmatprep.subr.bf16.mxu0 0
  %417 = vmatpush1.bf16.msra.mxu0 %v398
  %418 = vmatprep.subr.bf16.mxu0 0
  %419 = vmatpush1.bf16.msra.mxu0 %v397
  %420 = vmatprep.subr.bf16.mxu0 0
  %421 = vmatpush1.bf16.msra.mxu0 %v396
  %422 = vmatprep.subr.bf16.mxu0 0
  %423 = vmatpush1.bf16.msra.mxu0 %v395
  %424 = vmatprep.subr.bf16.mxu0 0
  %425 = vmatpush1.bf16.msra.mxu0 %v394
  %426 = vmatprep.subr.bf16.mxu0 0
  %427 = vmatpush2.bf16.msra.mxu0 0
  %428 = vmatprep.subr.bf16.mxu0 0
  %429 = vmatpush2.bf16.msra.mxu0 0
  %430 = vmatprep.subr.bf16.mxu0 0
  %431 = vmatpush2.bf16.msra.mxu0 0
  %432 = vmatprep.subr.bf16.mxu0 0
  %433 = vmatpush2.bf16.msra.mxu0 0
  %434 = vmatprep.subr.bf16.mxu0 0
  %435 = vmatpush2.bf16.msra.mxu0 0
  %436 = vmatprep.subr.bf16.mxu0 0
  %437 = vmatpush2.bf16.msra.mxu0 0
  %438 = vmatprep.subr.bf16.mxu0 0
  %439 = vmatpush2.bf16.msra.mxu0 0
  %440 = vmatprep.subr.bf16.mxu0 0
  %441 = vmatpush2.bf16.msra.mxu0 0
  %442 = vmatprep.mubr.bf16.mxu0 0
  %443 = vmatmul.mubr.bf16.gmra.mxu0 %v338
  %v444 = vpop.f32.mrf.mxu0
  %v445 = vadd.f32 0.0, %v444
  %v446 = vpop.f32.mrf.mxu0
  %v447 = vpop.f32.mrf.mxu0
  %v448 = vadd.f32 0.0, %v447
  %v449 = vpop.f32.mrf.mxu0
  %450 = vmatprep.mubr.bf16.mxu0 0
  %451 = vmatmul.mubr.bf16.gmra.mxu0 %v339
  %v452 = vpop.f32.mrf.mxu0
  %v453 = vadd.f32 0.0, %v452
  %v454 = vpop.f32.mrf.mxu0
  %v455 = vpop.f32.mrf.mxu0
  %v456 = vadd.f32 0.0, %v455
  %v457 = vpop.f32.mrf.mxu0
  %458 = vmatprep.mubr.bf16.mxu0 0
  %459 = vmatmul.mubr.bf16.gmra.mxu0 %v340
  %v460 = vpop.f32.mrf.mxu0
  %v461 = vadd.f32 0.0, %v460
  %v462 = vpop.f32.mrf.mxu0
  %v463 = vpop.f32.mrf.mxu0
  %v464 = vadd.f32 0.0, %v463
  %v465 = vpop.f32.mrf.mxu0
  %466 = vmatprep.mubr.bf16.mxu0 0
  %467 = vmatmul.mubr.bf16.gmra.mxu0 %v341
  %v468 = vpop.f32.mrf.mxu0
  %v469 = vadd.f32 0.0, %v468
  %v470 = vpop.f32.mrf.mxu0
  %v471 = vpop.f32.mrf.mxu0
  %v472 = vadd.f32 0.0, %v471
  %v473 = vpop.f32.mrf.mxu0
  %474 = vmatprep.mubr.bf16.mxu0 0
  %475 = vmatmul.mubr.bf16.gmra.mxu0 %v342
  %v476 = vpop.f32.mrf.mxu0
  %v477 = vadd.f32 0.0, %v476
  %v478 = vpop.f32.mrf.mxu0
  %v479 = vpop.f32.mrf.mxu0
  %v480 = vadd.f32 0.0, %v479
  %v481 = vpop.f32.mrf.mxu0
  %482 = vmatprep.mubr.bf16.mxu0 0
  %483 = vmatmul.mubr.bf16.gmra.mxu0 %v343
  %v484 = vpop.f32.mrf.mxu0
  %v485 = vadd.f32 0.0, %v484
  %v486 = vpop.f32.mrf.mxu0
  %v487 = vpop.f32.mrf.mxu0
  %v488 = vadd.f32 0.0, %v487
  %v489 = vpop.f32.mrf.mxu0
  %490 = vmatprep.mubr.bf16.mxu0 0
  %491 = vmatmul.mubr.bf16.gmra.mxu0 %v344
  %v492 = vpop.f32.mrf.mxu0
  %v493 = vadd.f32 0.0, %v492
  %v494 = vpop.f32.mrf.mxu0
  %v495 = vpop.f32.mrf.mxu0
  %v496 = vadd.f32 0.0, %v495
  %v497 = vpop.f32.mrf.mxu0
  %498 = vmatprep.mubr.bf16.mxu0 0
  %499 = vmatmul.mubr.bf16.gmra.mxu0 %v345
  %v500 = vpop.f32.mrf.mxu0
  %v501 = vadd.f32 0.0, %v500
  %v502 = vpop.f32.mrf.mxu0
  %v503 = vpop.f32.mrf.mxu0
  %v504 = vadd.f32 0.0, %v503
  %v505 = vpop.f32.mrf.mxu0
  %506 = vdwg.mxu0
  %v507 = vadd.f32 %v322, %v445
  %v508 = vadd.f32 %v323, %v448
  %v509 = vadd.f32 %v324, %v453
  %v510 = vadd.f32 %v325, %v456
  %v511 = vadd.f32 %v326, %v461
  %v512 = vadd.f32 %v327, %v464
  %v513 = vadd.f32 %v328, %v469
  %v514 = vadd.f32 %v329, %v472
  %v515 = vadd.f32 %v330, %v477
  %v516 = vadd.f32 %v331, %v480
  %v517 = vadd.f32 %v332, %v485
  %v518 = vadd.f32 %v333, %v488
  %v519 = vadd.f32 %v334, %v493
  %v520 = vadd.f32 %v335, %v496
  %v521 = vadd.f32 %v336, %v501
  %v522 = vadd.f32 %v337, %v504
  %523 = vst.msk [vmem:[#allocation2] sm:$0xff] %vm120, %v507
  %524 = vst.msk [vmem:[#allocation2 + $0x8] sm:$0xff] %vm120, %v508
  %525 = vst.msk [vmem:[#allocation2 + $0x10] sm:$0xff] %vm120, %v509
  %526 = vst.msk [vmem:[#allocation2 + $0x18] sm:$0xff] %vm120, %v510
  %527 = vst.msk [vmem:[#allocation2 + $0x20] sm:$0xff] %vm120, %v511
  %528 = vst.msk [vmem:[#allocation2 + $0x28] sm:$0xff] %vm120, %v512
  %529 = vst.msk [vmem:[#allocation2 + $0x30] sm:$0xff] %vm120, %v513
  %530 = vst.msk [vmem:[#allocation2 + $0x38] sm:$0xff] %vm120, %v514
  %531 = vst.msk [vmem:[#allocation2 + $0x40] sm:$0xff] %vm120, %v515
  %532 = vst.msk [vmem:[#allocation2 + $0x48] sm:$0xff] %vm120, %v516
  %533 = vst.msk [vmem:[#allocation2 + $0x50] sm:$0xff] %vm120, %v517
  %534 = vst.msk [vmem:[#allocation2 + $0x58] sm:$0xff] %vm120, %v518
  %535 = vst.msk [vmem:[#allocation2 + $0x60] sm:$0xff] %vm120, %v519
  %536 = vst.msk [vmem:[#allocation2 + $0x68] sm:$0xff] %vm120, %v520
  %537 = vst.msk [vmem:[#allocation2 + $0x70] sm:$0xff] %vm120, %v521
  %538 = vst.msk [vmem:[#allocation2 + $0x78] sm:$0xff] %vm120, %v522
  // Predicated region
  $region26: #{_forward_impl.1} parent=0 // pred_check
    %p539 = pneg %p21
  $region27: #{_forward_impl.1} parent=0 // pred_check_branch
    %541 = sbr.rel (%p539) target = $region29
  $region28: #{_forward_impl.1} parent=0 // pred_region
    %v542 = vld [vmem:[#allocation2] sm:$0xff]
    %v543 = vld [vmem:[#allocation2 + $0x8] sm:$0xff]
    %v544 = vld [vmem:[#allocation2 + $0x10] sm:$0xff]
    %v545 = vld [vmem:[#allocation2 + $0x18] sm:$0xff]
    %v546 = vld [vmem:[#allocation2 + $0x20] sm:$0xff]
    %v547 = vld [vmem:[#allocation2 + $0x28] sm:$0xff]
    %v548 = vld [vmem:[#allocation2 + $0x30] sm:$0xff]
    %v549 = vld [vmem:[#allocation2 + $0x38] sm:$0xff]
    %v550 = vld [vmem:[#allocation2 + $0x40] sm:$0xff]
    %v551 = vld [vmem:[#allocation2 + $0x48] sm:$0xff]
    %v552 = vld [vmem:[#allocation2 + $0x50] sm:$0xff]
    %v553 = vld [vmem:[#allocation2 + $0x58] sm:$0xff]
    %v554 = vld [vmem:[#allocation2 + $0x60] sm:$0xff]
    %v555 = vld [vmem:[#allocation2 + $0x68] sm:$0xff]
    %v556 = vld [vmem:[#allocation2 + $0x70] sm:$0xff]
    %v557 = vld [vmem:[#allocation2 + $0x78] sm:$0xff]
    %v558 = vld [vmem:[%s4] sm:$0x1]
    %v559 = vunpack.c.l.bf16 %v558
    %v560 = vlaneseq
    %v561 = vshrl.u32 %v560, 7
    %v562 = vsub.s32 0, %v561
    %v563 = vrot.slane %v559, %v562
    %v564 = vadd.f32 %v542, %v563
    %v565 = vadd.f32 %v543, %v563
    %v566 = vadd.f32 %v544, %v563
    %v567 = vadd.f32 %v545, %v563
    %v568 = vadd.f32 %v546, %v563
    %v569 = vadd.f32 %v547, %v563
    %v570 = vadd.f32 %v548, %v563
    %v571 = vadd.f32 %v549, %v563
    %v572 = vadd.f32 %v550, %v563
    %v573 = vadd.f32 %v551, %v563
    %v574 = vadd.f32 %v552, %v563
    %v575 = vadd.f32 %v553, %v563
    %v576 = vadd.f32 %v554, %v563
    %v577 = vadd.f32 %v555, %v563
    %v578 = vadd.f32 %v556, %v563
    %v579 = vadd.f32 %v557, %v563
    %580 = vst.msk [vmem:[%s5] sm:$0xff] %vm120, %v564
    %581 = vst.msk [vmem:[%s5 + $0x8] sm:$0xff] %vm120, %v565
    %582 = vst.msk [vmem:[%s5 + $0x10] sm:$0xff] %vm120, %v566
    %583 = vst.msk [vmem:[%s5 + $0x18] sm:$0xff] %vm120, %v567
    %584 = vst.msk [vmem:[%s5 + $0x20] sm:$0xff] %vm120, %v568
    %585 = vst.msk [vmem:[%s5 + $0x28] sm:$0xff] %vm120, %v569
    %586 = vst.msk [vmem:[%s5 + $0x30] sm:$0xff] %vm120, %v570
    %587 = vst.msk [vmem:[%s5 + $0x38] sm:$0xff] %vm120, %v571
    %588 = vst.msk [vmem:[%s5 + $0x40] sm:$0xff] %vm120, %v572
    %589 = vst.msk [vmem:[%s5 + $0x48] sm:$0xff] %vm120, %v573
    %590 = vst.msk [vmem:[%s5 + $0x50] sm:$0xff] %vm120, %v574
    %591 = vst.msk [vmem:[%s5 + $0x58] sm:$0xff] %vm120, %v575
    %592 = vst.msk [vmem:[%s5 + $0x60] sm:$0xff] %vm120, %v576
    %593 = vst.msk [vmem:[%s5 + $0x68] sm:$0xff] %vm120, %v577
    %594 = vst.msk [vmem:[%s5 + $0x70] sm:$0xff] %vm120, %v578
    %595 = vst.msk [vmem:[%s5 + $0x78] sm:$0xff] %vm120, %v579
  $region29: #{_forward_impl.1} parent=0 // pred_fallthru
    _
  // Predicated region
  $region30: #{_forward_impl.1} parent=0 // pred_check
    _
  $region31: #{_forward_impl.1} parent=0 // pred_check_branch
    %597 = sbr.rel (0) target = $region33
  $region32: #{_forward_impl.1} parent=0 // pred_region
    _
  $region33: #{_forward_impl.1} parent=0 // pred_fallthru
    _
  // Predicated region
  $region34: #{_forward_impl.1} parent=0 // pred_check
    _
  $region35: #{_forward_impl.1} parent=0 // pred_check_branch
    %599 = sbr.rel (0) target = $region37
  $region36: #{_forward_impl.1} parent=0 // pred_region
    _
  $region37: #{_forward_impl.1} parent=0 // pred_fallthru
    _

</llo_original>
